<compile_context>
chip_gen: v5e
topology: v5e:2x2
jax: 0.10.0
libtpu: 0.0.40
codegen_flags: <defaults>
</compile_context>

<pallas_src>
import functools

import jax
import jax.numpy as jnp
from jax.experimental import pallas as pl
from jax.experimental.pallas import tpu as pltpu

_LANE = 128     # lane width (last dim)
_SUBLANE = 8    # f32 sublane granularity (second-to-last dim)


def _round_up(x, m):
    return ((x + m - 1) // m) * m


def _decoder_mlp_kernel(n_layers, compute_dtype, *refs):
    """Fused MLP: (n_layers-1) x [Linear+ReLU] followed by a final Linear.

    refs = (x_ref, w0_ref, b0_ref, w1_ref, b1_ref, ..., o_ref)
    x / output are per-grid-step batch tiles; weights/biases are whole (padded)
    arrays, VMEM-resident across the batch grid (constant index_map).  Matmuls
    run on the MXU with f32 accumulation; bias add + ReLU run on the VPU.
    """
    x_ref = refs[0]
    o_ref = refs[-1]
    param_refs = refs[1:-1]

    h = x_ref[...]
    for li in range(n_layers):
        w_ref = param_refs[2 * li]
        b_ref = param_refs[2 * li + 1]
        a = h.astype(compute_dtype)  # operands f32 or bf16, accumulate f32
        h = jnp.dot(a, w_ref[...], preferred_element_type=jnp.float32) + b_ref[...]
        if li < n_layers - 1:        # hidden layers get ReLU; the final Linear does not
            h = jnp.maximum(h, 0.0)
    o_ref[...] = h.astype(o_ref.dtype)


def decoder_forward(x, weights, biases, sigma, *, block_batch=2048, use_bf16=True):
    """Run the Decoder forward pass.

    x:        [batch, embedding_dim] float32
    weights:  list of [in, out] float32 arrays (hidden layers then final layer)
    biases:   list of [out] float32 arrays
    sigma:    [data_dim] float32 parameter
    Returns (logits [batch, data_dim] float32, sigma) — matching the PyTorch module.
    """
    assert len(weights) == len(biases)
    n_layers = len(weights)
    batch, emb = x.shape
    assert weights[0].shape[0] == emb
    data_dim = weights[-1].shape[1]

    compute_dtype = jnp.bfloat16 if use_bf16 else jnp.float32

    # ---- Pad only the OUT feature dims to the 128-lane width (lane-dense
    # stores).  Layer-0 in-dim stays == emb so x needs no padded copy; later
    # layers' in-dims are padded to the previous layer's padded out-dim with
    # zero rows (padded activation columns are exactly zero, so this is exact).
    dims_out = [w.shape[1] for w in weights]
    pad_out = [_round_up(d, _LANE) for d in dims_out]
    pad_in = [emb] + pad_out[:-1]
    data_pad = pad_out[-1]

    flat_params = []
    for li, (w, b) in enumerate(zip(weights, biases)):
        wp = jnp.zeros((pad_in[li], pad_out[li]), compute_dtype)
        wp = wp.at[: w.shape[0], : w.shape[1]].set(w.astype(compute_dtype))
        bp = jnp.zeros((1, pad_out[li]), jnp.float32)
        bp = bp.at[0, : b.shape[0]].set(b.astype(jnp.float32))
        flat_params.append(wp)
        flat_params.append(bp)

    # ---- Batch tiling: aim for ~8 grid steps (keeps both v7x TensorCores busy
    # and the DMA pipeline alive), grow the tile up to block_batch at large
    # batch, never below the 8-row sublane granule.  Ragged last block is
    # handled by Pallas (out-of-bounds output rows are masked, never written).
    tb = pl.cdiv(batch, 8)
    tb = _round_up(max(tb, _SUBLANE), _SUBLANE)
    tb = min(tb, _round_up(max(block_batch, _SUBLANE), _SUBLANE))
    grid = (pl.cdiv(batch, tb),)

    in_specs = [pl.BlockSpec((tb, emb), lambda i: (i, 0))]
    for li in range(n_layers):
        # Constant index_map -> params stay resident in VMEM across batch steps.
        in_specs.append(pl.BlockSpec((pad_in[li], pad_out[li]), lambda i: (0, 0)))
        in_specs.append(pl.BlockSpec((1, pad_out[li]), lambda i: (0, 0)))
    out_specs = pl.BlockSpec((tb, data_pad), lambda i: (i, 0))

    params_bytes = sum(p.size * p.dtype.itemsize for p in flat_params)
    flops = 2 * batch * sum(pi * po for pi, po in zip(pad_in, pad_out))
    bytes_accessed = (
        x.size * x.dtype.itemsize + params_bytes + batch * data_pad * 4
    )

    # Rough resident-VMEM estimate; only raise the scoped limit if a big tile
    # would exceed the conservative (v5e) 16 MiB default.  Cap below v7x's
    # 64 MiB physical VMEM.
    vmem_est = (
        2 * tb * emb * x.dtype.itemsize      # double-buffered x tile
        + 2 * tb * data_pad * 4              # double-buffered output tile (f32)
        + 2 * params_bytes                   # params (+ double-buffer slack)
        + 4 * tb * max(pad_out) * 4          # live f32 layer intermediates
    )
    compiler_kwargs = dict(dimension_semantics=("parallel",))
    if vmem_est > 12 * 1024 * 1024:
        compiler_kwargs["vmem_limit_bytes"] = int(
            min(2 * vmem_est, 56 * 1024 * 1024)
        )

    kernel = functools.partial(_decoder_mlp_kernel, n_layers, compute_dtype)

    out_padded = pl.pallas_call(
        kernel,
        out_shape=jax.ShapeDtypeStruct((batch, data_pad), jnp.float32),
        grid=grid,
        in_specs=in_specs,
        out_specs=out_specs,
        compiler_params=pltpu.CompilerParams(**compiler_kwargs),
        cost_estimate=pl.CostEstimate(
            flops=flops, transcendentals=0, bytes_accessed=bytes_accessed
        ),
    )(x, *flat_params)

    # Only the (cheap) logical-column slice remains; no batch padding/slicing.
    # TODO(synk): downstream consumers could take the padded [batch, 128] slab
    # directly and fuse this slice away entirely.
    return out_padded[:, :data_dim], sigma


def init_decoder_params(key, embedding_dim, decompress_dims, data_dim):
    """Deterministic parameter init mirroring the module's __init__ shapes."""
    dims_in = [embedding_dim] + list(decompress_dims)
    dims_out = list(decompress_dims) + [data_dim]
    weights, biases = [], []
    for d_in, d_out in zip(dims_in, dims_out):
        key, kw, kb = jax.random.split(key, 3)
        # PyTorch Linear default: U(-1/sqrt(in), 1/sqrt(in)) for both W and b.
        bound = 1.0 / jnp.sqrt(jnp.float32(d_in))
        weights.append(
            jax.random.uniform(kw, (d_in, d_out), jnp.float32, -bound, bound)
        )
        biases.append(
            jax.random.uniform(kb, (d_out,), jnp.float32, -bound, bound)
        )
    sigma = jnp.ones((data_dim,), jnp.float32) * 0.1
    return weights, biases, sigma


def decoder_reference(x, weights, biases, sigma):
    """Pure-JAX reference for correctness checking."""
    h = x
    for li, (w, b) in enumerate(zip(weights, biases)):
        h = h @ w + b
        if li < len(weights) - 1:
            h = jnp.maximum(h, 0.0)
    return h, sigma


if __name__ == "__main__":
    # Small shapes consistent with the module:
    #   embedding_dim=32, decompress_dims=(64, 32), data_dim=16
    embedding_dim = 32
    decompress_dims = (64, 32)
    data_dim = 16

    key = jax.random.PRNGKey(0)
    weights, biases, sigma = init_decoder_params(
        key, embedding_dim, decompress_dims, data_dim
    )

    # --- Case 1: tiny batch, f32 operands, tight tolerance. ---
    batch = 8
    key, kx = jax.random.split(key)
    x = jax.random.normal(kx, (batch, embedding_dim), jnp.float32)

    out, sig = decoder_forward(x, weights, biases, sigma, use_bf16=False)
    out = jax.block_until_ready(out)
    sig = jax.block_until_ready(sig)

    ref_out, ref_sig = decoder_reference(x, weights, biases, sigma)
    assert out.shape == (batch, data_dim)
    assert sig.shape == (data_dim,)
    assert jnp.allclose(out, ref_out, atol=1e-5, rtol=1e-5)
    assert jnp.allclose(sig, ref_sig)

    # --- Case 2: ragged batch / multi-step grid (tb=40, 8 steps), f32 path. ---
    batch2 = 300
    key, kx2 = jax.random.split(key)
    x2 = jax.random.normal(kx2, (batch2, embedding_dim), jnp.float32)
    out2, _ = decoder_forward(x2, weights, biases, sigma, use_bf16=False)
    out2 = jax.block_until_ready(out2)
    ref_out2, _ = decoder_reference(x2, weights, biases, sigma)
    assert out2.shape == (batch2, data_dim)
    assert jnp.allclose(out2, ref_out2, atol=1e-5, rtol=1e-5)

    # --- Case 3: default path (bf16 operands, f32 accumulation), loose tol. ---
    out3, _ = decoder_forward(x2, weights, biases, sigma)
    out3 = jax.block_until_ready(out3)
    assert out3.shape == (batch2, data_dim)
    assert jnp.allclose(out3, ref_out2, atol=1e-1, rtol=1e-1)

    print("KERNEL_OK")
</pallas_src>

<mosaic_0001>
module attributes {stable_mosaic.version = 11 : i64} {
  func.func @_decoder_mlp_kernel(%arg0: i32, %arg1: memref<8x32xf32, #tpu.memory_space<vmem>>, %arg2: memref<32x128xf32, #tpu.memory_space<vmem>>, %arg3: memref<1x128xf32, #tpu.memory_space<vmem>>, %arg4: memref<128x128xf32, #tpu.memory_space<vmem>>, %arg5: memref<1x128xf32, #tpu.memory_space<vmem>>, %arg6: memref<128x128xf32, #tpu.memory_space<vmem>>, %arg7: memref<1x128xf32, #tpu.memory_space<vmem>>, %arg8: memref<8x128xf32, #tpu.memory_space<vmem>>) attributes {dimension_semantics = [#tpu.dimension_semantics<parallel>], iteration_bounds = array<i64: 1>, scalar_prefetch = 0 : i64, scratch_operands = 0 : i64, tpu.core_type = #tpu.core_type<tc>, window_params = [{transform_indices = @transform_0, window_bounds = array<i64: 8, 32>}, {pipeline_mode = #tpu.pipeline_mode<synchronous>, transform_indices = @transform_1, window_bounds = array<i64: 32, 128>}, {pipeline_mode = #tpu.pipeline_mode<synchronous>, transform_indices = @transform_2, window_bounds = array<i64: 1, 128>}, {pipeline_mode = #tpu.pipeline_mode<synchronous>, transform_indices = @transform_3, window_bounds = array<i64: 128, 128>}, {pipeline_mode = #tpu.pipeline_mode<synchronous>, transform_indices = @transform_4, window_bounds = array<i64: 1, 128>}, {pipeline_mode = #tpu.pipeline_mode<synchronous>, transform_indices = @transform_5, window_bounds = array<i64: 128, 128>}, {pipeline_mode = #tpu.pipeline_mode<synchronous>, transform_indices = @transform_6, window_bounds = array<i64: 1, 128>}, {transform_indices = @transform_7, window_bounds = array<i64: 8, 128>}]} {
    %c0 = arith.constant 0 : index
    %c0_0 = arith.constant 0 : index
    %0 = vector.load %arg1[%c0, %c0_0] : memref<8x32xf32, #tpu.memory_space<vmem>>, vector<8x32xf32>
    %c0_1 = arith.constant 0 : index
    %c0_2 = arith.constant 0 : index
    %1 = vector.load %arg2[%c0_1, %c0_2] : memref<32x128xf32, #tpu.memory_space<vmem>>, vector<32x128xf32>
    %cst = arith.constant dense<0.000000e+00> : vector<8x128xf32>
    %2 = tpu.matmul %0, %1, %cst {dimension_numbers = #tpu.dot_dimension_numbers<[1], [0], [0], [1], [0, 0, 1, 1], [], []>} : vector<8x32xf32>, vector<32x128xf32>, vector<8x128xf32> -> vector<8x128xf32>
    %c0_3 = arith.constant 0 : index
    %c0_4 = arith.constant 0 : index
    %3 = vector.load %arg3[%c0_3, %c0_4] : memref<1x128xf32, #tpu.memory_space<vmem>>, vector<1x128xf32>
    %4 = vector.broadcast %3 : vector<1x128xf32> to vector<8x128xf32>
    %5 = arith.addf %2, %4 : vector<8x128xf32>
    %cst_5 = arith.constant 0.000000e+00 : f32
    %6 = vector.broadcast %cst_5 : f32 to vector<8x128xf32>
    %7 = arith.maximumf %5, %6 : vector<8x128xf32>
    %c0_6 = arith.constant 0 : index
    %c0_7 = arith.constant 0 : index
    %8 = vector.load %arg4[%c0_6, %c0_7] : memref<128x128xf32, #tpu.memory_space<vmem>>, vector<128x128xf32>
    %cst_8 = arith.constant dense<0.000000e+00> : vector<8x128xf32>
    %9 = tpu.matmul %7, %8, %cst_8 {dimension_numbers = #tpu.dot_dimension_numbers<[1], [0], [0], [1], [0, 0, 1, 1], [], []>} : vector<8x128xf32>, vector<128x128xf32>, vector<8x128xf32> -> vector<8x128xf32>
    %c0_9 = arith.constant 0 : index
    %c0_10 = arith.constant 0 : index
    %10 = vector.load %arg5[%c0_9, %c0_10] : memref<1x128xf32, #tpu.memory_space<vmem>>, vector<1x128xf32>
    %11 = vector.broadcast %10 : vector<1x128xf32> to vector<8x128xf32>
    %12 = arith.addf %9, %11 : vector<8x128xf32>
    %cst_11 = arith.constant 0.000000e+00 : f32
    %13 = vector.broadcast %cst_11 : f32 to vector<8x128xf32>
    %14 = arith.maximumf %12, %13 : vector<8x128xf32>
    %c0_12 = arith.constant 0 : index
    %c0_13 = arith.constant 0 : index
    %15 = vector.load %arg6[%c0_12, %c0_13] : memref<128x128xf32, #tpu.memory_space<vmem>>, vector<128x128xf32>
    %cst_14 = arith.constant dense<0.000000e+00> : vector<8x128xf32>
    %16 = tpu.matmul %14, %15, %cst_14 {dimension_numbers = #tpu.dot_dimension_numbers<[1], [0], [0], [1], [0, 0, 1, 1], [], []>} : vector<8x128xf32>, vector<128x128xf32>, vector<8x128xf32> -> vector<8x128xf32>
    %c0_15 = arith.constant 0 : index
    %c0_16 = arith.constant 0 : index
    %17 = vector.load %arg7[%c0_15, %c0_16] : memref<1x128xf32, #tpu.memory_space<vmem>>, vector<1x128xf32>
    %18 = vector.broadcast %17 : vector<1x128xf32> to vector<8x128xf32>
    %19 = arith.addf %16, %18 : vector<8x128xf32>
    %c0_17 = arith.constant 0 : index
    %c0_18 = arith.constant 0 : index
    %20 = vector.load %arg8[%c0_17, %c0_18] : memref<8x128xf32, #tpu.memory_space<vmem>>, vector<8x128xf32>
    tpu.vector_store %arg8[%c0_17, %c0_18], %19 {strides = array<i32>} : memref<8x128xf32, #tpu.memory_space<vmem>>, vector<8x128xf32>,
    return
  }
  func.func @transform_0(%arg0: i32) -> (i32, i32) {
    %c0_i32 = arith.constant 0 : i32
    %c0_i32_0 = arith.constant 0 : i32
    return %arg0, %c0_i32 : i32, i32
  }
  func.func @transform_1(%arg0: i32) -> (i32, i32) {
    %c0_i32 = arith.constant 0 : i32
    %c0_i32_0 = arith.constant 0 : i32
    %c0_i32_1 = arith.constant 0 : i32
    return %c0_i32, %c0_i32_0 : i32, i32
  }
  func.func @transform_2(%arg0: i32) -> (i32, i32) {
    %c0_i32 = arith.constant 0 : i32
    %c0_i32_0 = arith.constant 0 : i32
    %c0_i32_1 = arith.constant 0 : i32
    return %c0_i32, %c0_i32_0 : i32, i32
  }
  func.func @transform_3(%arg0: i32) -> (i32, i32) {
    %c0_i32 = arith.constant 0 : i32
    %c0_i32_0 = arith.constant 0 : i32
    %c0_i32_1 = arith.constant 0 : i32
    return %c0_i32, %c0_i32_0 : i32, i32
  }
  func.func @transform_4(%arg0: i32) -> (i32, i32) {
    %c0_i32 = arith.constant 0 : i32
    %c0_i32_0 = arith.constant 0 : i32
    %c0_i32_1 = arith.constant 0 : i32
    return %c0_i32, %c0_i32_0 : i32, i32
  }
  func.func @transform_5(%arg0: i32) -> (i32, i32) {
    %c0_i32 = arith.constant 0 : i32
    %c0_i32_0 = arith.constant 0 : i32
    %c0_i32_1 = arith.constant 0 : i32
    return %c0_i32, %c0_i32_0 : i32, i32
  }
  func.func @transform_6(%arg0: i32) -> (i32, i32) {
    %c0_i32 = arith.constant 0 : i32
    %c0_i32_0 = arith.constant 0 : i32
    %c0_i32_1 = arith.constant 0 : i32
    return %c0_i32, %c0_i32_0 : i32, i32
  }
  func.func @transform_7(%arg0: i32) -> (i32, i32) {
    %c0_i32 = arith.constant 0 : i32
    %c0_i32_0 = arith.constant 0 : i32
    return %arg0, %c0_i32 : i32, i32
  }
}

</mosaic_0001>

<llo_original>
// kernel: tpu_custom_call.1
$region0: #{tpu_custom_call.1}
  #allocation0 [shape = 'u32[]', space=smem, size = 0x4, offset = 0x4, fixed_abs, tag = 'smem constant byte address 0x4 - core index']
  #allocation1 [shape = 'u32[72,128]{1,0:T(1,128)}', space=vmem, size = 0x9000, scoped, tag = 'internal scratch']
  %s0 = inlined_call_operand.hbm [shape: f32[8,32], index: 0, kind: input, shape index: {}]
  %s1 = inlined_call_operand.hbm [shape: f32[32,128], index: 1, kind: input, shape index: {}]
  %s2 = inlined_call_operand.vmem [shape: f32[1,128], index: 2, kind: input, shape index: {}]
  %s3 = inlined_call_operand.hbm [shape: f32[128,128], index: 3, kind: input, shape index: {}]
  %s4 = inlined_call_operand.vmem [shape: f32[1,128], index: 4, kind: input, shape index: {}]
  %s5 = inlined_call_operand.hbm [shape: f32[128,128], index: 5, kind: input, shape index: {}]
  %s6 = inlined_call_operand.vmem [shape: f32[1,128], index: 6, kind: input, shape index: {}]
  %s7 = inlined_call_operand.hbm [shape: f32[8,128], index: 7, kind: output, shape index: {}]
  %s8 = sld [smem:[#allocation0]]
  $region54: #{tpu_custom_call.1} parent=0
    _
  %s10 = ssub.s32 1, %s8
  %s11 = scalar_select 0, %s10, %s8
  $region1: #{tpu_custom_call.1} parent=0
    #allocation2 [shape = 'u8[4096]{0}', space=vmem, size = 0x1000, scoped, tag = 'input window, operand 0, single buffered']
    #allocation3 [shape = 's32[1]{0}', space=sflag, size = 0x4, scoped, tag = 'scoped memory for tpu_custom_call.1']
    #allocation4 [shape = 's32[1]{0}', space=sflag, size = 0x4, scoped, tag = 'scoped memory for tpu_custom_call.1']
    #allocation5 [shape = 'u8[16384]{0}', space=vmem, size = 0x4000, scoped, tag = 'input window, operand 1, single buffered']
    #allocation6 [shape = 's32[1]{0}', space=sflag, size = 0x4, scoped, tag = 'scoped memory for tpu_custom_call.1']
    #allocation7 [shape = 'u8[65536]{0}', space=vmem, size = 0x10000, scoped, tag = 'input window, operand 3, single buffered']
    #allocation8 [shape = 'u8[65536]{0}', space=vmem, size = 0x10000, scoped, tag = 'input window, operand 5, single buffered']
    #allocation9 [shape = 's32[1]{0}', space=sflag, size = 0x4, scoped, tag = 'scoped memory for tpu_custom_call.1']
    #allocation10 [shape = 'u8[4096]{0}', space=vmem, size = 0x1000, scoped, tag = 'output window, operand 0, single buffered']
    %12 = vsyncpa [#allocation3], 0
    %13 = vsyncpa [#allocation6], 0
    %14 = vsyncpa [#allocation9], 0
    %15 = vsyncpa [#allocation4], 0
    // Predicated region
    $region2: #{tpu_custom_call.1} parent=1 // pred_check
      _
    $region3: #{tpu_custom_call.1} parent=1 // pred_check_branch
      %17 = sbr.rel (0) target = $region5
    $region4: #{tpu_custom_call.1} parent=1 // pred_region
      %19 = vsyncadd [#allocation3], 0
      %s21 = sshll.u32 %s0, 4
      %s22 = int_to_ptr.hbm [resolvable:$true] %s21
      %s23 = sshll.u32 [#allocation2], 4
      %s24 = int_to_ptr.vmem [resolvable:$true] %s23
      %26 = dma.hbm_to_vmem [thread:$0]  %s22, 128, %s24, [#allocation3]
    $region5: #{tpu_custom_call.1} parent=1 // pred_fallthru
      _
    // Predicated region
    $region6: #{tpu_custom_call.1} parent=1 // pred_check
      _
    $region7: #{tpu_custom_call.1} parent=1 // pred_check_branch
      %28 = sbr.rel (0) target = $region9
    $region8: #{tpu_custom_call.1} parent=1 // pred_region
      %30 = vsyncadd [#allocation6], 0
      %s31 = sshll.u32 %s1, 4
      %s32 = int_to_ptr.hbm [resolvable:$true] %s31
      %s33 = sshll.u32 [#allocation5], 4
      %s34 = int_to_ptr.vmem [resolvable:$true] %s33
      %39 = dma.hbm_to_vmem [thread:$0]  %s32, 512, %s34, [#allocation6], 128, 128, 8
    $region9: #{tpu_custom_call.1} parent=1 // pred_fallthru
      _
    // Predicated region
    $region10: #{tpu_custom_call.1} parent=1 // pred_check
      _
    $region11: #{tpu_custom_call.1} parent=1 // pred_check_branch
      %41 = sbr.rel (0) target = $region13
    $region12: #{tpu_custom_call.1} parent=1 // pred_region
      _
    $region13: #{tpu_custom_call.1} parent=1 // pred_fallthru
      _
    // Predicated region
    $region14: #{tpu_custom_call.1} parent=1 // pred_check
      _
    $region15: #{tpu_custom_call.1} parent=1 // pred_check_branch
      %43 = sbr.rel (0) target = $region17
    $region16: #{tpu_custom_call.1} parent=1 // pred_region
      %45 = vsyncadd [#allocation6], 0
      %s46 = sshll.u32 %s3, 4
      %s47 = int_to_ptr.hbm [resolvable:$true] %s46
      %s48 = sshll.u32 [#allocation7], 4
      %s49 = int_to_ptr.vmem [resolvable:$true] %s48
      %54 = dma.hbm_to_vmem [thread:$0]  %s47, 2048, %s49, [#allocation6], 128, 128, 8
    $region17: #{tpu_custom_call.1} parent=1 // pred_fallthru
      _
    // Predicated region
    $region18: #{tpu_custom_call.1} parent=1 // pred_check
      _
    $region19: #{tpu_custom_call.1} parent=1 // pred_check_branch
      %56 = sbr.rel (0) target = $region21
    $region20: #{tpu_custom_call.1} parent=1 // pred_region
      _
    $region21: #{tpu_custom_call.1} parent=1 // pred_fallthru
      _
    // Predicated region
    $region22: #{tpu_custom_call.1} parent=1 // pred_check
      _
    $region23: #{tpu_custom_call.1} parent=1 // pred_check_branch
      %58 = sbr.rel (0) target = $region25
    $region24: #{tpu_custom_call.1} parent=1 // pred_region
      %60 = vsyncadd [#allocation9], 0
      %s61 = sshll.u32 %s5, 4
      %s62 = int_to_ptr.hbm [resolvable:$true] %s61
      %s63 = sshll.u32 [#allocation8], 4
      %s64 = int_to_ptr.vmem [resolvable:$true] %s63
      %69 = dma.hbm_to_vmem [thread:$0]  %s62, 2048, %s64, [#allocation9], 128, 128, 8
    $region25: #{tpu_custom_call.1} parent=1 // pred_fallthru
      _
    // Predicated region
    $region26: #{tpu_custom_call.1} parent=1 // pred_check
      _
    $region27: #{tpu_custom_call.1} parent=1 // pred_check_branch
      %71 = sbr.rel (0) target = $region29
    $region28: #{tpu_custom_call.1} parent=1 // pred_region
      _
    $region29: #{tpu_custom_call.1} parent=1 // pred_fallthru
      _
    // Predicated region
    $region30: #{tpu_custom_call.1} parent=1 // pred_check
      _
    $region31: #{tpu_custom_call.1} parent=1 // pred_check_branch
      %73 = sbr.rel (0) target = $region33
    $region32: #{tpu_custom_call.1} parent=1 // pred_region
      %75 = dma.done [#allocation3], 128
    $region33: #{tpu_custom_call.1} parent=1 // pred_fallthru
      _
    // Predicated region
    $region34: #{tpu_custom_call.1} parent=1 // pred_check
      _
    $region35: #{tpu_custom_call.1} parent=1 // pred_check_branch
      %77 = sbr.rel (0) target = $region37
    $region36: #{tpu_custom_call.1} parent=1 // pred_region
      %79 = dma.done [#allocation6], 512
    $region37: #{tpu_custom_call.1} parent=1 // pred_fallthru
      _
    // Predicated region
    $region38: #{tpu_custom_call.1} parent=1 // pred_check
      _
    $region39: #{tpu_custom_call.1} parent=1 // pred_check_branch
      %81 = sbr.rel (0) target = $region41
    $region40: #{tpu_custom_call.1} parent=1 // pred_region
      %83 = dma.done [#allocation6], 2048
    $region41: #{tpu_custom_call.1} parent=1 // pred_fallthru
      _
    // Predicated region
    $region42: #{tpu_custom_call.1} parent=1 // pred_check
      _
    $region43: #{tpu_custom_call.1} parent=1 // pred_check_branch
      %85 = sbr.rel (0) target = $region45
    $region44: #{tpu_custom_call.1} parent=1 // pred_region
      %87 = dma.done [#allocation9], 2048
    $region45: #{tpu_custom_call.1} parent=1 // pred_fallthru
      _
    %v88 = vld [vmem:[#allocation2] sm:$0xff]
    %v89 = vld [vmem:[#allocation5] sm:$0xff]
    %v90 = vld [vmem:[#allocation5 + $0x8] sm:$0xff]
    %v91 = vld [vmem:[#allocation5 + $0x10] sm:$0xff]
    %v92 = vld [vmem:[#allocation5 + $0x18] sm:$0xff]
    %v93 = vld [vmem:[%s2] sm:$0x1]
    %v95 = vperm.slane %v93, 0
    %vm97 = vcmask 261120
    %v99 = vsel %vm97, %v88, 0
    %101 = vmatpush.msra.mxu0 0.0
    %102 = vmatpush.msra.mxu0 0.0
    %103 = vmatpush.msra.mxu0 0.0
    %104 = vmatpush.msra.mxu0 0.0
    %105 = vmatpush.msra.mxu0 0.0
    %106 = vmatpush.msra.mxu0 0.0
    %107 = vmatpush.msra.mxu0 0.0
    %108 = vmatpush.msra.mxu0 0.0
    %109 = vmatpush.msra.mxu0 0.0
    %110 = vmatpush.msra.mxu0 0.0
    %111 = vmatpush.msra.mxu0 0.0
    %112 = vmatpush.msra.mxu0 0.0
    %113 = vmatpush.msra.mxu0 %v92
    %114 = vmatpush.msra.mxu0 %v91
    %115 = vmatpush.msra.mxu0 %v90
    %116 = vmatpush.msra.mxu0 %v89
    %117 = vmatmul.f32.gmra.mxu0 %v99
    %v118 = vpop.f32.mrf.mxu0
    %v119 = vadd.f32 %v95, %v118
    %120 = vdwg.mxu0
    %v121 = vmax.f32 %v119, 0.0
    %v122 = vld [vmem:[#allocation7] sm:$0xff]
    %v123 = vld [vmem:[#allocation7 + $0x8] sm:$0xff]
    %v124 = vld [vmem:[#allocation7 + $0x10] sm:$0xff]
    %v125 = vld [vmem:[#allocation7 + $0x18] sm:$0xff]
    %v126 = vld [vmem:[#allocation7 + $0x20] sm:$0xff]
    %v127 = vld [vmem:[#allocation7 + $0x28] sm:$0xff]
    %v128 = vld [vmem:[#allocation7 + $0x30] sm:$0xff]
    %v129 = vld [vmem:[#allocation7 + $0x38] sm:$0xff]
    %v130 = vld [vmem:[#allocation7 + $0x40] sm:$0xff]
    %v131 = vld [vmem:[#allocation7 + $0x48] sm:$0xff]
    %v132 = vld [vmem:[#allocation7 + $0x50] sm:$0xff]
    %v133 = vld [vmem:[#allocation7 + $0x58] sm:$0xff]
    %v134 = vld [vmem:[#allocation7 + $0x60] sm:$0xff]
    %v135 = vld [vmem:[#allocation7 + $0x68] sm:$0xff]
    %v136 = vld [vmem:[#allocation7 + $0x70] sm:$0xff]
    %v137 = vld [vmem:[#allocation7 + $0x78] sm:$0xff]
    %v138 = vld [vmem:[%s4] sm:$0x1]
    %v140 = vperm.slane %v138, 0
    %142 = vmatpush.msra.mxu0 %v137
    %143 = vmatpush.msra.mxu0 %v136
    %144 = vmatpush.msra.mxu0 %v135
    %145 = vmatpush.msra.mxu0 %v134
    %146 = vmatpush.msra.mxu0 %v133
    %147 = vmatpush.msra.mxu0 %v132
    %148 = vmatpush.msra.mxu0 %v131
    %149 = vmatpush.msra.mxu0 %v130
    %150 = vmatpush.msra.mxu0 %v129
    %151 = vmatpush.msra.mxu0 %v128
    %152 = vmatpush.msra.mxu0 %v127
    %153 = vmatpush.msra.mxu0 %v126
    %154 = vmatpush.msra.mxu0 %v125
    %155 = vmatpush.msra.mxu0 %v124
    %156 = vmatpush.msra.mxu0 %v123
    %157 = vmatpush.msra.mxu0 %v122
    %158 = vmatmul.f32.gmra.mxu0 %v121
    %v159 = vpop.f32.mrf.mxu0
    %v160 = vadd.f32 %v140, %v159
    %161 = vdwg.mxu0
    %v162 = vmax.f32 %v160, 0.0
    %v163 = vld [vmem:[#allocation8] sm:$0xff]
    %v164 = vld [vmem:[#allocation8 + $0x8] sm:$0xff]
    %v165 = vld [vmem:[#allocation8 + $0x10] sm:$0xff]
    %v166 = vld [vmem:[#allocation8 + $0x18] sm:$0xff]
    %v167 = vld [vmem:[#allocation8 + $0x20] sm:$0xff]
    %v168 = vld [vmem:[#allocation8 + $0x28] sm:$0xff]
    %v169 = vld [vmem:[#allocation8 + $0x30] sm:$0xff]
    %v170 = vld [vmem:[#allocation8 + $0x38] sm:$0xff]
    %v171 = vld [vmem:[#allocation8 + $0x40] sm:$0xff]
    %v172 = vld [vmem:[#allocation8 + $0x48] sm:$0xff]
    %v173 = vld [vmem:[#allocation8 + $0x50] sm:$0xff]
    %v174 = vld [vmem:[#allocation8 + $0x58] sm:$0xff]
    %v175 = vld [vmem:[#allocation8 + $0x60] sm:$0xff]
    %v176 = vld [vmem:[#allocation8 + $0x68] sm:$0xff]
    %v177 = vld [vmem:[#allocation8 + $0x70] sm:$0xff]
    %v178 = vld [vmem:[#allocation8 + $0x78] sm:$0xff]
    %v179 = vld [vmem:[%s6] sm:$0x1]
    %v181 = vperm.slane %v179, 0
    %183 = vmatpush.msra.mxu0 %v178
    %184 = vmatpush.msra.mxu0 %v177
    %185 = vmatpush.msra.mxu0 %v176
    %186 = vmatpush.msra.mxu0 %v175
    %187 = vmatpush.msra.mxu0 %v174
    %188 = vmatpush.msra.mxu0 %v173
    %189 = vmatpush.msra.mxu0 %v172
    %190 = vmatpush.msra.mxu0 %v171
    %191 = vmatpush.msra.mxu0 %v170
    %192 = vmatpush.msra.mxu0 %v169
    %193 = vmatpush.msra.mxu0 %v168
    %194 = vmatpush.msra.mxu0 %v167
    %195 = vmatpush.msra.mxu0 %v166
    %196 = vmatpush.msra.mxu0 %v165
    %197 = vmatpush.msra.mxu0 %v164
    %198 = vmatpush.msra.mxu0 %v163
    %199 = vmatmul.f32.gmra.mxu0 %v162
    %v200 = vpop.f32.mrf.mxu0
    %v201 = vadd.f32 %v181, %v200
    %202 = vdwg.mxu0
    %203 = vst [vmem:[#allocation10] sm:$0xff] %v201
    // Predicated region
    $region46: #{tpu_custom_call.1} parent=1 // pred_check
      _
    $region47: #{tpu_custom_call.1} parent=1 // pred_check_branch
      %205 = sbr.rel (0) target = $region49
    $region48: #{tpu_custom_call.1} parent=1 // pred_region
      %207 = vsyncadd [#allocation4], 0
      %s209 = sshll.u32 [#allocation10], 4
      %s210 = int_to_ptr.vmem [resolvable:$true] %s209
      %s211 = sshll.u32 %s7, 4
      %s212 = int_to_ptr.hbm [resolvable:$true] %s211
      %214 = dma.vmem_to_hbm [thread:$0]  %s210, 128, %s212, [#allocation4]
    $region49: #{tpu_custom_call.1} parent=1 // pred_fallthru
      _
    // Predicated region
    $region50: #{tpu_custom_call.1} parent=1 // pred_check
      _
    $region51: #{tpu_custom_call.1} parent=1 // pred_check_branch
      %216 = sbr.rel (0) target = $region53
    $region52: #{tpu_custom_call.1} parent=1 // pred_region
      %218 = dma.done [#allocation4], 128
    $region53: #{tpu_custom_call.1} parent=1 // pred_fallthru
      _
    %219 = vsyncpa [#allocation3], 1
    %220 = vsyncpa [#allocation6], 1
    %221 = vsyncpa [#allocation9], 1
    %222 = vsyncpa [#allocation4], 1

</llo_original>
